<compile_context>
chip_gen: v7x
topology: tpu7x:2x2x1
jax: 0.10.0
libtpu: 0.0.40
codegen_flags: <defaults>
</compile_context>

<pallas_src>
import numpy as np
import jax
import jax.numpy as jnp
from jax.experimental import pallas as pl
from jax.experimental.pallas import tpu as pltpu

# Per-grid-step tile budget in bytes, INCLUDING the 2x double-buffering factor.
_TILE_BUDGET_BYTES = 32 * 1024 * 1024
# Scoped VMEM limit we request (safe on v5e/v6e 128 MiB and v7x 64 MiB physical).
_VMEM_LIMIT_BYTES = 48 * 1024 * 1024
# Below this total traffic, XLA's native concatenate beats any Pallas kernel.
_MIN_PALLAS_BYTES = 256 * 1024


def _sublane_granularity(dtypes):
    """Smallest safe sublane-tile multiple across all participating dtypes."""
    gran = 8
    for dt in dtypes:
        isz = max(1, np.dtype(dt).itemsize)
        gran = max(gran, 8 * max(1, 4 // isz))  # f32 -> 8, bf16 -> 16, int8/fp8 -> 32
    return gran


def _make_lane_kernel(offsets, widths):
    """Concat along the last (lane) dim of 2-D tiles: per-input direct stores."""
    def kernel(*refs):
        *in_refs, out_ref = refs
        for r, off, w in zip(in_refs, offsets, widths):
            out_ref[:, off:off + w] = r[...].astype(out_ref.dtype)
    return kernel


def _make_sublane_kernel(offsets, sizes):
    """Concat along the middle (sublane) dim of 3-D tiles: per-input direct stores."""
    def kernel(*refs):
        *in_refs, out_ref = refs
        for r, off, s in zip(in_refs, offsets, sizes):
            out_ref[:, off:off + s, :] = r[...].astype(out_ref.dtype)
    return kernel


def join_table(tensors, dimension, *, min_pallas_bytes=_MIN_PALLAS_BYTES):
    """Pallas equivalent of torch.cat(tensors, dimension)."""
    tensors = [jnp.asarray(t) for t in tensors]
    assert len(tensors) >= 1
    nd = tensors[0].ndim
    dim = dimension if dimension >= 0 else dimension + nd
    assert 0 <= dim < nd

    base_shape = tensors[0].shape
    for t in tensors:
        assert t.ndim == nd
        assert t.shape[:dim] == base_shape[:dim]
        assert t.shape[dim + 1:] == base_shape[dim + 1:]

    out_dtype = jnp.result_type(*[t.dtype for t in tensors])
    sizes = [int(t.shape[dim]) for t in tensors]
    total = int(sum(sizes))
    out_shape = tuple(base_shape[:dim]) + (total,) + tuple(base_shape[dim + 1:])

    if len(tensors) == 1:
        return tensors[0].astype(out_dtype)

    outer = int(np.prod(base_shape[:dim], dtype=np.int64)) if dim > 0 else 1
    inner = int(np.prod(base_shape[dim + 1:], dtype=np.int64)) if dim + 1 < nd else 1

    out_isz = np.dtype(out_dtype).itemsize
    in_iszs = [np.dtype(t.dtype).itemsize for t in tensors]
    total_bytes = sum(t.size * isz for t, isz in zip(tensors, in_iszs)) \
        + outer * total * inner * out_isz

    # Fast path: tiny copies / degenerate shapes -> native XLA concatenate.
    if total_bytes < min_pallas_bytes or total == 0 or outer * inner == 0:
        return jnp.concatenate(tensors, axis=dim).astype(out_dtype)

    # Static concat offsets (in units of the concat dim).
    offsets, acc = [], 0
    for s in sizes:
        offsets.append(acc)
        acc += s

    # ---------- Path 1: lane-dense 2-D view, concat along the last (lane) dim.
    if outer > 1:
        widths = [s * inner for s in sizes]
        out_w = total * inner
        per_to = 2 * (sum(w * isz for w, isz in zip(widths, in_iszs))
                      + out_w * out_isz)
        gran = _sublane_granularity([t.dtype for t in tensors] + [out_dtype])
        to_cap = _TILE_BUDGET_BYTES // per_to if per_to > 0 else outer
        if to_cap >= outer:
            to = outer                       # full dim: always a legal block size
        elif to_cap >= gran:
            to = (to_cap // gran) * gran     # keep sublane tile a safe multiple
        else:
            to = 0
        if to > 0:
            kern = _make_lane_kernel([o * inner for o in offsets], widths)
            out2d = pl.pallas_call(
                kern,
                out_shape=jax.ShapeDtypeStruct((outer, out_w), out_dtype),
                grid=(pl.cdiv(outer, to),),
                in_specs=[pl.BlockSpec((to, w), lambda o: (o, 0)) for w in widths],
                out_specs=pl.BlockSpec((to, out_w), lambda o: (o, 0)),
                compiler_params=pltpu.CompilerParams(
                    dimension_semantics=("parallel",),
                    vmem_limit_bytes=_VMEM_LIMIT_BYTES),
            )(*[t.reshape(outer, w) for t, w in zip(tensors, widths)])
            return out2d.reshape(out_shape)

    # ---------- Path 2: 3-D view, concat along sublanes, tile outer x inner.
    for ti_cand in (1024, 512, 256, 128):
        ti = min(inner, ti_cand)  # either full `inner` or a multiple of 128
        per_to = 2 * (sum(s * ti * isz for s, isz in zip(sizes, in_iszs))
                      + total * ti * out_isz)
        if per_to <= _TILE_BUDGET_BYTES:
            to = max(1, min(outer, _TILE_BUDGET_BYTES // per_to))
            kern = _make_sublane_kernel(offsets, sizes)
            out3d = pl.pallas_call(
                kern,
                out_shape=jax.ShapeDtypeStruct((outer, total, inner), out_dtype),
                grid=(pl.cdiv(outer, to), pl.cdiv(inner, ti)),
                in_specs=[pl.BlockSpec((to, s, ti), lambda o, i: (o, 0, i))
                          for s in sizes],
                out_specs=pl.BlockSpec((to, total, ti), lambda o, i: (o, 0, i)),
                compiler_params=pltpu.CompilerParams(
                    dimension_semantics=("parallel", "parallel"),
                    vmem_limit_bytes=_VMEM_LIMIT_BYTES),
            )(*[t.reshape(outer, s, inner) for t, s in zip(tensors, sizes)])
            return out3d.reshape(out_shape)

    # Shapes we cannot tile within the VMEM budget (e.g. one enormous row with
    # outer == 1): fall back to XLA's native concatenate.
    return jnp.concatenate(tensors, axis=dim).astype(out_dtype)


class JoinTable:
    """Mirror of the PyTorch module: forward(x) == torch.cat(x, self.dimension)."""

    def __init__(self, dimension):
        self.dimension = dimension

    def __call__(self, x):
        return join_table(x, self.dimension)


if __name__ == "__main__":
    key = jax.random.PRNGKey(0)
    k1, k2, k3 = jax.random.split(key, 3)

    # NCHW-style channel concat (dim=1).
    a = jax.random.normal(k1, (2, 4, 16, 16), dtype=jnp.float32)
    b = jax.random.normal(k2, (2, 3, 16, 16), dtype=jnp.float32)
    c = jax.random.normal(k3, (2, 5, 16, 16), dtype=jnp.float32)

    mod = JoinTable(dimension=1)
    out = jax.block_until_ready(mod([a, b, c]))  # tiny -> XLA fast path
    ref = jnp.concatenate([a, b, c], axis=1)
    assert out.shape == (2, 12, 16, 16), out.shape
    assert out.dtype == ref.dtype
    np.testing.assert_array_equal(np.asarray(out), np.asarray(ref))

    # Force the Pallas kernel on the same inputs (lane-dense path 1).
    out_p = jax.block_until_ready(join_table([a, b, c], 1, min_pallas_bytes=0))
    np.testing.assert_array_equal(np.asarray(out_p), np.asarray(ref))

    # Negative dimension (torch.cat(..., dim=-1)) through the Pallas kernel.
    out_last = jax.block_until_ready(join_table([a, a], -1, min_pallas_bytes=0))
    np.testing.assert_array_equal(
        np.asarray(out_last), np.asarray(jnp.concatenate([a, a], axis=-1)))

    # dim=0 concat exercises the 3-D sublane-concat path (outer == 1).
    d = jax.random.normal(k1, (6, 16, 128), dtype=jnp.float32)
    e = jax.random.normal(k2, (10, 16, 128), dtype=jnp.float32)
    out0 = jax.block_until_ready(join_table([d, e], 0, min_pallas_bytes=0))
    np.testing.assert_array_equal(
        np.asarray(out0), np.asarray(jnp.concatenate([d, e], axis=0)))

    # Mixed dtype: promotion happens inside the kernel at store time.
    bf = b.astype(jnp.bfloat16)
    out_mix = jax.block_until_ready(join_table([a, bf], 1, min_pallas_bytes=0))
    ref_mix = jnp.concatenate([a, bf.astype(jnp.float32)], axis=1)
    assert out_mix.dtype == jnp.float32
    np.testing.assert_array_equal(np.asarray(out_mix), np.asarray(ref_mix))

    print("KERNEL_OK")
</pallas_src>

<mosaic_0001>
module attributes {stable_mosaic.version = 11 : i64} {
  func.func @kernel(%arg0: i32, %arg1: memref<2x1024xf32, #tpu.memory_space<vmem>>, %arg2: memref<2x768xf32, #tpu.memory_space<vmem>>, %arg3: memref<2x1280xf32, #tpu.memory_space<vmem>>, %arg4: memref<2x3072xf32, #tpu.memory_space<vmem>>) attributes {dimension_semantics = [#tpu.dimension_semantics<parallel>], iteration_bounds = array<i64: 1>, scalar_prefetch = 0 : i64, scratch_operands = 0 : i64, tpu.core_type = #tpu.core_type<tc>, window_params = [{transform_indices = @transform_0, window_bounds = array<i64: 2, 1024>}, {transform_indices = @transform_1, window_bounds = array<i64: 2, 768>}, {transform_indices = @transform_2, window_bounds = array<i64: 2, 1280>}, {transform_indices = @transform_3, window_bounds = array<i64: 2, 3072>}]} {
    %c0 = arith.constant 0 : index
    %c0_0 = arith.constant 0 : index
    %0 = vector.load %arg1[%c0, %c0_0] : memref<2x1024xf32, #tpu.memory_space<vmem>>, vector<2x1024xf32>
    %c0_1 = arith.constant 0 : index
    %c0_2 = arith.constant 0 : index
    %1 = vector.load %arg4[%c0_1, %c0_2] : memref<2x3072xf32, #tpu.memory_space<vmem>>, vector<2x1024xf32>
    tpu.vector_store %arg4[%c0_1, %c0_2], %0 {strides = array<i32>} : memref<2x3072xf32, #tpu.memory_space<vmem>>, vector<2x1024xf32>,
    %c0_3 = arith.constant 0 : index
    %c0_4 = arith.constant 0 : index
    %2 = vector.load %arg2[%c0_3, %c0_4] : memref<2x768xf32, #tpu.memory_space<vmem>>, vector<2x768xf32>
    %c0_5 = arith.constant 0 : index
    %c1024 = arith.constant 1024 : index
    %3 = vector.load %arg4[%c0_5, %c1024] : memref<2x3072xf32, #tpu.memory_space<vmem>>, vector<2x768xf32>
    tpu.vector_store %arg4[%c0_5, %c1024], %2 {strides = array<i32>} : memref<2x3072xf32, #tpu.memory_space<vmem>>, vector<2x768xf32>,
    %c0_6 = arith.constant 0 : index
    %c0_7 = arith.constant 0 : index
    %4 = vector.load %arg3[%c0_6, %c0_7] : memref<2x1280xf32, #tpu.memory_space<vmem>>, vector<2x1280xf32>
    %c0_8 = arith.constant 0 : index
    %c1792 = arith.constant 1792 : index
    %5 = vector.load %arg4[%c0_8, %c1792] : memref<2x3072xf32, #tpu.memory_space<vmem>>, vector<2x1280xf32>
    tpu.vector_store %arg4[%c0_8, %c1792], %4 {strides = array<i32>} : memref<2x3072xf32, #tpu.memory_space<vmem>>, vector<2x1280xf32>,
    return
  }
  func.func @transform_0(%arg0: i32) -> (i32, i32) {
    %c0_i32 = arith.constant 0 : i32
    %c0_i32_0 = arith.constant 0 : i32
    return %arg0, %c0_i32 : i32, i32
  }
  func.func @transform_1(%arg0: i32) -> (i32, i32) {
    %c0_i32 = arith.constant 0 : i32
    %c0_i32_0 = arith.constant 0 : i32
    return %arg0, %c0_i32 : i32, i32
  }
  func.func @transform_2(%arg0: i32) -> (i32, i32) {
    %c0_i32 = arith.constant 0 : i32
    %c0_i32_0 = arith.constant 0 : i32
    return %arg0, %c0_i32 : i32, i32
  }
  func.func @transform_3(%arg0: i32) -> (i32, i32) {
    %c0_i32 = arith.constant 0 : i32
    %c0_i32_0 = arith.constant 0 : i32
    return %arg0, %c0_i32 : i32, i32
  }
}

</mosaic_0001>

<llo_original>
// kernel: tpu_custom_call.1
$region0: #{tpu_custom_call.1}
  #allocation0 [shape = 'u32[]', space=smem, size = 0x4, offset = 0x4, fixed_abs, tag = 'smem constant byte address 0x4 - core index']
  #allocation1 [shape = 'u32[144,128]{1,0:T(1,128)}', space=vmem, size = 0x12000, scoped, tag = 'internal scratch']
  %s0 = inlined_call_operand.hbm [shape: f32[2,1024], index: 0, kind: input, shape index: {}]
  %s1 = inlined_call_operand.hbm [shape: f32[2,768], index: 1, kind: input, shape index: {}]
  %s2 = inlined_call_operand.hbm [shape: f32[2,1280], index: 2, kind: input, shape index: {}]
  %s3 = inlined_call_operand.hbm [shape: f32[2,3072], index: 3, kind: output, shape index: {}]
  %s4 = sld [smem:[#allocation0]]
  $region34: #{tpu_custom_call.1} parent=0
    _
  %s6 = ssub.s32 1, %s4
  %s7 = scalar_select 0, %s6, %s4
  $region1: #{tpu_custom_call.1} parent=0
    #allocation2 [shape = 'u8[8192]{0}', space=vmem, size = 0x2000, scoped, tag = 'input window, operand 0, single buffered']
    #allocation3 [shape = 's32[1]{0}', space=sflag, size = 0x4, scoped, tag = 'scoped memory for tpu_custom_call.1']
    #allocation4 [shape = 's32[1]{0}', space=sflag, size = 0x4, scoped, tag = 'scoped memory for tpu_custom_call.1']
    #allocation5 [shape = 'u8[6144]{0}', space=vmem, size = 0x1800, scoped, tag = 'input window, operand 1, single buffered']
    #allocation6 [shape = 's32[1]{0}', space=sflag, size = 0x4, scoped, tag = 'scoped memory for tpu_custom_call.1']
    #allocation7 [shape = 'u8[10240]{0}', space=vmem, size = 0x2800, scoped, tag = 'input window, operand 2, single buffered']
    #allocation8 [shape = 'u8[24576]{0}', space=vmem, size = 0x6000, scoped, tag = 'output window, operand 0, single buffered']
    %8 = vsyncpa [#allocation3], 0
    %9 = vsyncpa [#allocation6], 0
    %10 = vsyncpa [#allocation4], 0
    // Predicated region
    $region2: #{tpu_custom_call.1} parent=1 // pred_check
      _
    $region3: #{tpu_custom_call.1} parent=1 // pred_check_branch
      %12 = sbr.rel (0) target = $region5
    $region4: #{tpu_custom_call.1} parent=1 // pred_region
      %s14 = ssub.s32 256, 256
      %15 = vsyncadd [#allocation3], %s14
      %s17 = sshll.u32 [#allocation2], 4
      %s18 = int_to_ptr.vmem [resolvable:$true] %s17
      %20 = dma.hbm_to_vmem [thread:$0]  %s0, 256, %s18, [#allocation3]
    $region5: #{tpu_custom_call.1} parent=1 // pred_fallthru
      _
    // Predicated region
    $region6: #{tpu_custom_call.1} parent=1 // pred_check
      _
    $region7: #{tpu_custom_call.1} parent=1 // pred_check_branch
      %22 = sbr.rel (0) target = $region9
    $region8: #{tpu_custom_call.1} parent=1 // pred_region
      %s24 = ssub.s32 192, 192
      %25 = vsyncadd [#allocation6], %s24
      %s27 = sshll.u32 [#allocation5], 4
      %s28 = int_to_ptr.vmem [resolvable:$true] %s27
      %30 = dma.hbm_to_vmem [thread:$0]  %s1, 192, %s28, [#allocation6]
    $region9: #{tpu_custom_call.1} parent=1 // pred_fallthru
      _
    // Predicated region
    $region10: #{tpu_custom_call.1} parent=1 // pred_check
      _
    $region11: #{tpu_custom_call.1} parent=1 // pred_check_branch
      %32 = sbr.rel (0) target = $region13
    $region12: #{tpu_custom_call.1} parent=1 // pred_region
      %s34 = ssub.s32 320, 320
      %35 = vsyncadd [#allocation6], %s34
      %s37 = sshll.u32 [#allocation7], 4
      %s38 = int_to_ptr.vmem [resolvable:$true] %s37
      %40 = dma.hbm_to_vmem [thread:$0]  %s2, 320, %s38, [#allocation6]
    $region13: #{tpu_custom_call.1} parent=1 // pred_fallthru
      _
    // Predicated region
    $region14: #{tpu_custom_call.1} parent=1 // pred_check
      _
    $region15: #{tpu_custom_call.1} parent=1 // pred_check_branch
      %42 = sbr.rel (0) target = $region17
    $region16: #{tpu_custom_call.1} parent=1 // pred_region
      %43 = dma.done [#allocation3], 256
    $region17: #{tpu_custom_call.1} parent=1 // pred_fallthru
      _
    // Predicated region
    $region18: #{tpu_custom_call.1} parent=1 // pred_check
      _
    $region19: #{tpu_custom_call.1} parent=1 // pred_check_branch
      %45 = sbr.rel (0) target = $region21
    $region20: #{tpu_custom_call.1} parent=1 // pred_region
      %46 = dma.done [#allocation6], 192
    $region21: #{tpu_custom_call.1} parent=1 // pred_fallthru
      _
    // Predicated region
    $region22: #{tpu_custom_call.1} parent=1 // pred_check
      _
    $region23: #{tpu_custom_call.1} parent=1 // pred_check_branch
      %48 = sbr.rel (0) target = $region25
    $region24: #{tpu_custom_call.1} parent=1 // pred_region
      %49 = dma.done [#allocation6], 320
    $region25: #{tpu_custom_call.1} parent=1 // pred_fallthru
      _
    %v50 = vld [vmem:[#allocation2] sm:$0xff]
    %v51 = vld [vmem:[#allocation2 + $0x8] sm:$0xff]
    %52 = vst [vmem:[#allocation8] sm:$0xff] %v50
    %53 = vst [vmem:[#allocation8 + $0x8] sm:$0xff] %v51
    %v54 = vld [vmem:[#allocation5] sm:$0xff]
    %v55 = vld [vmem:[#allocation5 + $0x8] sm:$0xf]
    %56 = vst [vmem:[#allocation8 + $0x10] sm:$0xff] %v54
    %57 = vst [vmem:[#allocation8 + $0x18] sm:$0xf] %v55
    %v58 = vld [vmem:[#allocation7] sm:$0xff]
    %v59 = vld [vmem:[#allocation7 + $0x8] sm:$0xff]
    %v60 = vld [vmem:[#allocation7 + $0x10] sm:$0xf]
    %61 = vst [vmem:[#allocation8 + $0x1c] sm:$0xff] %v58
    %62 = vst [vmem:[#allocation8 + $0x24] sm:$0xff] %v59
    %63 = vst [vmem:[#allocation8 + $0x2c] sm:$0xf] %v60
    // Predicated region
    $region26: #{tpu_custom_call.1} parent=1 // pred_check
      _
    $region27: #{tpu_custom_call.1} parent=1 // pred_check_branch
      %65 = sbr.rel (0) target = $region29
    $region28: #{tpu_custom_call.1} parent=1 // pred_region
      %s67 = ssub.s32 768, 768
      %68 = vsyncadd [#allocation4], %s67
      %s70 = sshll.u32 [#allocation8], 4
      %s71 = int_to_ptr.vmem [resolvable:$true] %s70
      %73 = dma.vmem_to_hbm [thread:$0]  %s71, 768, %s3, [#allocation4]
    $region29: #{tpu_custom_call.1} parent=1 // pred_fallthru
      _
    // Predicated region
    $region30: #{tpu_custom_call.1} parent=1 // pred_check
      _
    $region31: #{tpu_custom_call.1} parent=1 // pred_check_branch
      %75 = sbr.rel (0) target = $region33
    $region32: #{tpu_custom_call.1} parent=1 // pred_region
      %76 = dma.done [#allocation4], 768
    $region33: #{tpu_custom_call.1} parent=1 // pred_fallthru
      _
    %77 = vsyncpa [#allocation3], 1
    %78 = vsyncpa [#allocation6], 1
    %79 = vsyncpa [#allocation4], 1

</llo_original>
